<compile_context>
chip_gen: v6e
topology: v6e:2x2x1
jax: 0.10.0
libtpu: 0.0.40
codegen_flags: <defaults>
</compile_context>

<pallas_src>
import functools

import jax
import jax.numpy as jnp
from jax.experimental import pallas as pl
from jax.experimental.pallas import tpu as pltpu

_SUBLANE = 8                      # row-tile granularity
_MAX_ROW_TILE = 4096              # fewer, bigger grid steps (step overhead bound)
_VMEM_TILE_BUDGET = 8 * 1024 * 1024   # keep pipelined tiles well inside v5e's
                                       # 16 MiB default scoped VMEM (v6e/v7x: 32 MiB)


def _round_up(x, m):
    return ((x + m - 1) // m) * m


# ----------------------------------------------------------------------------
# GraphFeatures container (minimal JAX port of the torch tuple-like class)
# ----------------------------------------------------------------------------
class GraphFeatures:
    def __init__(self, node_attr=None, edge_attr=None):
        self.node_attr = node_attr
        self.edge_attr = edge_attr

    def __add__(self, y):
        if isinstance(y, GraphFeatures):
            return GraphFeatures(self.node_attr + y.node_attr,
                                 self.edge_attr + y.edge_attr)
        return GraphFeatures(self.node_attr + y, self.edge_attr + y)

    def __iadd__(self, y):
        return self.__add__(y)

    def __mul__(self, y):
        if isinstance(y, GraphFeatures):
            return GraphFeatures(self.node_attr * y.node_attr,
                                 self.edge_attr * y.edge_attr)
        return GraphFeatures(self.node_attr * y, self.edge_attr * y)

    def __rmul__(self, y):
        return self.__mul__(y)

    def __imul__(self, y):
        return self.__mul__(y)

    def __truediv__(self, y):
        if isinstance(y, GraphFeatures):
            return GraphFeatures(self.node_attr / y.node_attr,
                                 self.edge_attr / y.edge_attr)
        return GraphFeatures(self.node_attr / y, self.edge_attr / y)

    def __rtruediv__(self, y):
        if isinstance(y, GraphFeatures):
            return GraphFeatures(y.node_attr / self.node_attr,
                                 y.edge_attr / self.edge_attr)
        return GraphFeatures(y / self.node_attr, y / self.edge_attr)

    def __getitem__(self, attr):
        if "node" in attr:
            return self.node_attr
        if "edge" in attr:
            return self.edge_attr
        return None

    @staticmethod
    def cat(x, dim=0):
        node_attr = jnp.concatenate([y.node_attr for y in x], axis=dim)
        edge_attr = jnp.concatenate([y.edge_attr for y in x], axis=dim)
        return GraphFeatures(node_attr, edge_attr)


# ----------------------------------------------------------------------------
# Pallas kernel: fused 2-layer MLP  y = relu(x @ W1 + b1) @ W2 + b2
# Refs are all 2-D; x / W1 / W2 are bf16 (MXU), accumulate + epilogue in f32.
# ----------------------------------------------------------------------------
def _fused_mlp_kernel(x_ref, w1_ref, b1_ref, w2_ref, b2_ref, o_ref):
    h = jnp.dot(x_ref[...], w1_ref[...], preferred_element_type=jnp.float32)
    h = jnp.maximum(h + b1_ref[...], 0.0)                 # f32 epilogue
    y = jnp.dot(h.astype(jnp.bfloat16), w2_ref[...],
                preferred_element_type=jnp.float32)
    o_ref[...] = (y + b2_ref[...]).astype(o_ref.dtype)


def _choose_row_tile(m, k, n):
    """Biggest row tile that fits the VMEM budget (x bf16 triple-buffered,
    y f32 double-buffered), capped at _MAX_ROW_TILE, multiple of 8."""
    per_row = 3 * k * 2 + 2 * n * 4
    cap = max(_SUBLANE, (_VMEM_TILE_BUDGET // per_row) // _SUBLANE * _SUBLANE)
    return max(_SUBLANE, min(_MAX_ROW_TILE, cap, _round_up(m, _SUBLANE)))


def fused_mlp(x, w1, b1, w2, b2):
    """x: [M, K] float, w1: [K, H] bf16, b1: [1, H] f32, w2: [H, N] bf16,
    b2: [1, N] f32  ->  [M, N] f32.  One fused pallas_call, natural shapes."""
    m, k = x.shape
    h = w1.shape[1]
    n = w2.shape[1]
    if m == 0:                                   # degenerate graph: no rows
        return jnp.zeros((0, n), jnp.float32)

    # Cast to bf16 outside the kernel (numerically identical to the in-kernel
    # cast; under jit it fuses with the producer) -> halves x DMA bytes.
    x = x.astype(jnp.bfloat16)

    row_tile = _choose_row_tile(m, k, n)
    rows = pl.cdiv(m, row_tile)                  # partial last block is masked

    # Deeper input pipelining when the grid is long enough: per-step compute is
    # tiny, so the x DMA is otherwise exposed on short grids.
    if rows >= 3:
        x_spec = pl.BlockSpec((row_tile, k), lambda r: (r, 0),
                              pipeline_mode=pl.Buffered(3))
    else:
        x_spec = pl.BlockSpec((row_tile, k), lambda r: (r, 0))

    flops = 2 * m * (k * h + h * n)
    bytes_accessed = (m * k * 2 + w1.size * 2 + w2.size * 2
                      + b1.size * 4 + b2.size * 4 + m * n * 4)

    return pl.pallas_call(
        _fused_mlp_kernel,
        out_shape=jax.ShapeDtypeStruct((m, n), jnp.float32),
        grid=(rows,),
        in_specs=[
            x_spec,
            # Weights/biases: constant block index -> DMA'd once, VMEM-resident.
            pl.BlockSpec((k, h), lambda r: (0, 0)),
            pl.BlockSpec((1, h), lambda r: (0, 0)),
            pl.BlockSpec((h, n), lambda r: (0, 0)),
            pl.BlockSpec((1, n), lambda r: (0, 0)),
        ],
        out_specs=pl.BlockSpec((row_tile, n), lambda r: (r, 0)),
        compiler_params=pltpu.CompilerParams(
            # Single row-tile axis, parallel: v7x's two TensorCores share the
            # row-tile pool of each branch (no node/edge imbalance).
            dimension_semantics=("parallel",),
            vmem_limit_bytes=32 * 1024 * 1024),
        cost_estimate=pl.CostEstimate(
            flops=flops, transcendentals=0, bytes_accessed=bytes_accessed),
    )(x, w1, b1, w2, b2)


_fused_mlp_jit = jax.jit(fused_mlp)


# Both branches inside one jit so the bf16 casts fuse and XLA can schedule the
# two (independent) pallas_calls back to back with no host round trip.
@jax.jit
def _graph_update_jit(node_attr, edge_attr,
                      nw1, nb1, nw2, nb2, ew1, eb1, ew2, eb2):
    node = fused_mlp(node_attr, nw1, nb1, nw2, nb2)
    edge = fused_mlp(edge_attr, ew1, eb1, ew2, eb2)
    return node, edge


# ----------------------------------------------------------------------------
# Small MLP built on the fused Pallas kernel (natural-dim weights, bf16)
# ----------------------------------------------------------------------------
class PallasMLP:
    def __init__(self, key, in_dim, hidden_dim, out_dim):
        k1, k2 = jax.random.split(key)
        self.in_dim, self.hidden_dim, self.out_dim = in_dim, hidden_dim, out_dim

        # Deterministic synthetic init (Glorot-ish scaling).
        w1 = jax.random.normal(k1, (in_dim, hidden_dim), jnp.float32) / jnp.sqrt(in_dim)
        w2 = jax.random.normal(k2, (hidden_dim, out_dim), jnp.float32) / jnp.sqrt(hidden_dim)
        self.w1, self.w2 = w1, w2
        self.b1 = jnp.zeros((1, hidden_dim), jnp.float32)
        self.b2 = jnp.zeros((1, out_dim), jnp.float32)
        # bf16 weights for the MXU; no lane padding (natural shapes).
        self.w1_bf16 = w1.astype(jnp.bfloat16)
        self.w2_bf16 = w2.astype(jnp.bfloat16)

    def __call__(self, x):
        return _fused_mlp_jit(x, self.w1_bf16, self.b1, self.w2_bf16, self.b2)

    def reference(self, x):
        """Pure-JAX reference with the same numerics (bf16 matmul inputs,
        f32 accumulate/epilogue)."""
        xb = x.astype(jnp.bfloat16)
        h = jnp.dot(xb, self.w1_bf16, preferred_element_type=jnp.float32) + self.b1
        h = jnp.maximum(h, 0.0)
        return jnp.dot(h.astype(jnp.bfloat16), self.w2_bf16,
                       preferred_element_type=jnp.float32) + self.b2


# ----------------------------------------------------------------------------
# GraphFeatureUpdate port
# ----------------------------------------------------------------------------
class GraphFeatureUpdate:
    def __init__(self, node_f=None, edge_f=None):
        self.node_f = node_f if node_f is not None else (lambda x: x)
        self.edge_f = edge_f if edge_f is not None else (lambda x: x)
        self.in_features = ["node_attr", "edge_attr"]
        self.out_features = ["node_attr", "edge_attr"]
        self._fused = isinstance(node_f, PallasMLP) and isinstance(edge_f, PallasMLP)

    def __call__(self, g):
        if self._fused:
            node, edge = _graph_update_jit(
                g.node_attr, g.edge_attr,
                self.node_f.w1_bf16, self.node_f.b1,
                self.node_f.w2_bf16, self.node_f.b2,
                self.edge_f.w1_bf16, self.edge_f.b1,
                self.edge_f.w2_bf16, self.edge_f.b2)
            return GraphFeatures(node, edge)
        edge = self.edge_f(g.edge_attr)
        node = self.node_f(g.node_attr)
        return GraphFeatures(node, edge)

    def reg_error(self):
        return sum(k.reg_error() for k in (self.node_f, self.edge_f)
                   if hasattr(k, "reg_error"))


if __name__ == "__main__":
    key = jax.random.PRNGKey(0)
    k_nw, k_ew, k_nx, k_ex, k_nx2, k_ex2 = jax.random.split(key, 6)

    # Small shapes consistent with the module.
    num_nodes, node_dim = 16, 32
    num_edges, edge_dim = 32, 32
    hidden = 32

    node_attr = jax.random.normal(k_nx, (num_nodes, node_dim), jnp.float32)
    edge_attr = jax.random.normal(k_ex, (num_edges, edge_dim), jnp.float32)

    node_f = PallasMLP(k_nw, node_dim, hidden, node_dim)
    edge_f = PallasMLP(k_ew, edge_dim, hidden, edge_dim)
    module = GraphFeatureUpdate(node_f=node_f, edge_f=edge_f)

    g_out = module(GraphFeatures(node_attr, edge_attr))
    jax.block_until_ready(g_out.node_attr)
    jax.block_until_ready(g_out.edge_attr)

    ref_node = node_f.reference(node_attr)
    ref_edge = edge_f.reference(edge_attr)
    assert g_out.node_attr.shape == (num_nodes, node_dim)
    assert g_out.edge_attr.shape == (num_edges, edge_dim)
    assert jnp.allclose(g_out.node_attr, ref_node, atol=2e-2, rtol=2e-2)
    assert jnp.allclose(g_out.edge_attr, ref_edge, atol=2e-2, rtol=2e-2)

    # Larger, asymmetric graph (edges >> nodes): exercises multi-tile grids,
    # Buffered(3) input pipelining, partial (masked) last row blocks and
    # per-branch row counts.
    big_nodes, big_edges, big_hidden = 500, 10000, 64
    node_attr2 = jax.random.normal(k_nx2, (big_nodes, node_dim), jnp.float32)
    edge_attr2 = jax.random.normal(k_ex2, (big_edges, edge_dim), jnp.float32)
    node_f2 = PallasMLP(k_nw, node_dim, big_hidden, node_dim)
    edge_f2 = PallasMLP(k_ew, edge_dim, big_hidden, edge_dim)
    module2 = GraphFeatureUpdate(node_f=node_f2, edge_f=edge_f2)
    g_out2 = module2(GraphFeatures(node_attr2, edge_attr2))
    jax.block_until_ready(g_out2.node_attr)
    jax.block_until_ready(g_out2.edge_attr)
    assert jnp.allclose(g_out2.node_attr, node_f2.reference(node_attr2),
                        atol=2e-2, rtol=2e-2)
    assert jnp.allclose(g_out2.edge_attr, edge_f2.reference(edge_attr2),
                        atol=2e-2, rtol=2e-2)

    # Default (identity) updaters keep the original module semantics.
    g_id = GraphFeatureUpdate()(GraphFeatures(node_attr, edge_attr))
    assert jnp.allclose(g_id.node_attr, node_attr)
    assert jnp.allclose(g_id.edge_attr, edge_attr)

    print("KERNEL_OK")
</pallas_src>

<mosaic_0001>
module attributes {stable_mosaic.version = 11 : i64} {
  func.func @_fused_mlp_kernel(%arg0: i32, %arg1: memref<16x32xbf16, #tpu.memory_space<vmem>>, %arg2: memref<32x32xbf16, #tpu.memory_space<vmem>>, %arg3: memref<1x32xf32, #tpu.memory_space<vmem>>, %arg4: memref<32x32xbf16, #tpu.memory_space<vmem>>, %arg5: memref<1x32xf32, #tpu.memory_space<vmem>>, %arg6: memref<16x32xf32, #tpu.memory_space<vmem>>) attributes {dimension_semantics = [#tpu.dimension_semantics<parallel>], iteration_bounds = array<i64: 1>, scalar_prefetch = 0 : i64, scratch_operands = 0 : i64, tpu.core_type = #tpu.core_type<tc>, window_params = [{transform_indices = @transform_0, window_bounds = array<i64: 16, 32>}, {pipeline_mode = #tpu.pipeline_mode<synchronous>, transform_indices = @transform_1, window_bounds = array<i64: 32, 32>}, {pipeline_mode = #tpu.pipeline_mode<synchronous>, transform_indices = @transform_2, window_bounds = array<i64: 1, 32>}, {pipeline_mode = #tpu.pipeline_mode<synchronous>, transform_indices = @transform_3, window_bounds = array<i64: 32, 32>}, {pipeline_mode = #tpu.pipeline_mode<synchronous>, transform_indices = @transform_4, window_bounds = array<i64: 1, 32>}, {transform_indices = @transform_5, window_bounds = array<i64: 16, 32>}]} {
    %c0 = arith.constant 0 : index
    %c0_0 = arith.constant 0 : index
    %0 = vector.load %arg1[%c0, %c0_0] : memref<16x32xbf16, #tpu.memory_space<vmem>>, vector<16x32xbf16>
    %c0_1 = arith.constant 0 : index
    %c0_2 = arith.constant 0 : index
    %1 = vector.load %arg2[%c0_1, %c0_2] : memref<32x32xbf16, #tpu.memory_space<vmem>>, vector<32x32xbf16>
    %cst = arith.constant dense<0.000000e+00> : vector<16x32xf32>
    %2 = tpu.matmul %0, %1, %cst {dimension_numbers = #tpu.dot_dimension_numbers<[1], [0], [0], [1], [0, 0, 1, 1], [], []>} : vector<16x32xbf16>, vector<32x32xbf16>, vector<16x32xf32> -> vector<16x32xf32>
    %c0_3 = arith.constant 0 : index
    %c0_4 = arith.constant 0 : index
    %3 = vector.load %arg3[%c0_3, %c0_4] : memref<1x32xf32, #tpu.memory_space<vmem>>, vector<1x32xf32>
    %4 = vector.broadcast %3 : vector<1x32xf32> to vector<16x32xf32>
    %5 = arith.addf %2, %4 : vector<16x32xf32>
    %cst_5 = arith.constant 0.000000e+00 : f32
    %6 = vector.broadcast %cst_5 : f32 to vector<16x32xf32>
    %7 = arith.maximumf %5, %6 : vector<16x32xf32>
    %8 = arith.truncf %7 : vector<16x32xf32> to vector<16x32xbf16>
    %c0_6 = arith.constant 0 : index
    %c0_7 = arith.constant 0 : index
    %9 = vector.load %arg4[%c0_6, %c0_7] : memref<32x32xbf16, #tpu.memory_space<vmem>>, vector<32x32xbf16>
    %cst_8 = arith.constant dense<0.000000e+00> : vector<16x32xf32>
    %10 = tpu.matmul %8, %9, %cst_8 {dimension_numbers = #tpu.dot_dimension_numbers<[1], [0], [0], [1], [0, 0, 1, 1], [], []>} : vector<16x32xbf16>, vector<32x32xbf16>, vector<16x32xf32> -> vector<16x32xf32>
    %c0_9 = arith.constant 0 : index
    %c0_10 = arith.constant 0 : index
    %11 = vector.load %arg5[%c0_9, %c0_10] : memref<1x32xf32, #tpu.memory_space<vmem>>, vector<1x32xf32>
    %12 = vector.broadcast %11 : vector<1x32xf32> to vector<16x32xf32>
    %13 = arith.addf %10, %12 : vector<16x32xf32>
    %c0_11 = arith.constant 0 : index
    %c0_12 = arith.constant 0 : index
    %14 = vector.load %arg6[%c0_11, %c0_12] : memref<16x32xf32, #tpu.memory_space<vmem>>, vector<16x32xf32>
    tpu.vector_store %arg6[%c0_11, %c0_12], %13 {strides = array<i32>} : memref<16x32xf32, #tpu.memory_space<vmem>>, vector<16x32xf32>,
    return
  }
  func.func @transform_0(%arg0: i32) -> (i32, i32) {
    %c0_i32 = arith.constant 0 : i32
    %c0_i32_0 = arith.constant 0 : i32
    return %arg0, %c0_i32 : i32, i32
  }
  func.func @transform_1(%arg0: i32) -> (i32, i32) {
    %c0_i32 = arith.constant 0 : i32
    %c0_i32_0 = arith.constant 0 : i32
    %c0_i32_1 = arith.constant 0 : i32
    return %c0_i32, %c0_i32_0 : i32, i32
  }
  func.func @transform_2(%arg0: i32) -> (i32, i32) {
    %c0_i32 = arith.constant 0 : i32
    %c0_i32_0 = arith.constant 0 : i32
    %c0_i32_1 = arith.constant 0 : i32
    return %c0_i32, %c0_i32_0 : i32, i32
  }
  func.func @transform_3(%arg0: i32) -> (i32, i32) {
    %c0_i32 = arith.constant 0 : i32
    %c0_i32_0 = arith.constant 0 : i32
    %c0_i32_1 = arith.constant 0 : i32
    return %c0_i32, %c0_i32_0 : i32, i32
  }
  func.func @transform_4(%arg0: i32) -> (i32, i32) {
    %c0_i32 = arith.constant 0 : i32
    %c0_i32_0 = arith.constant 0 : i32
    %c0_i32_1 = arith.constant 0 : i32
    return %c0_i32, %c0_i32_0 : i32, i32
  }
  func.func @transform_5(%arg0: i32) -> (i32, i32) {
    %c0_i32 = arith.constant 0 : i32
    %c0_i32_0 = arith.constant 0 : i32
    return %arg0, %c0_i32 : i32, i32
  }
}

module attributes {stable_mosaic.version = 11 : i64} {
  func.func @_fused_mlp_kernel(%arg0: i32, %arg1: memref<32x32xbf16, #tpu.memory_space<vmem>>, %arg2: memref<32x32xbf16, #tpu.memory_space<vmem>>, %arg3: memref<1x32xf32, #tpu.memory_space<vmem>>, %arg4: memref<32x32xbf16, #tpu.memory_space<vmem>>, %arg5: memref<1x32xf32, #tpu.memory_space<vmem>>, %arg6: memref<32x32xf32, #tpu.memory_space<vmem>>) attributes {dimension_semantics = [#tpu.dimension_semantics<parallel>], iteration_bounds = array<i64: 1>, scalar_prefetch = 0 : i64, scratch_operands = 0 : i64, tpu.core_type = #tpu.core_type<tc>, window_params = [{transform_indices = @transform_0, window_bounds = array<i64: 32, 32>}, {pipeline_mode = #tpu.pipeline_mode<synchronous>, transform_indices = @transform_1, window_bounds = array<i64: 32, 32>}, {pipeline_mode = #tpu.pipeline_mode<synchronous>, transform_indices = @transform_2, window_bounds = array<i64: 1, 32>}, {pipeline_mode = #tpu.pipeline_mode<synchronous>, transform_indices = @transform_3, window_bounds = array<i64: 32, 32>}, {pipeline_mode = #tpu.pipeline_mode<synchronous>, transform_indices = @transform_4, window_bounds = array<i64: 1, 32>}, {transform_indices = @transform_5, window_bounds = array<i64: 32, 32>}]} {
    %c0 = arith.constant 0 : index
    %c0_0 = arith.constant 0 : index
    %0 = vector.load %arg1[%c0, %c0_0] : memref<32x32xbf16, #tpu.memory_space<vmem>>, vector<32x32xbf16>
    %c0_1 = arith.constant 0 : index
    %c0_2 = arith.constant 0 : index
    %1 = vector.load %arg2[%c0_1, %c0_2] : memref<32x32xbf16, #tpu.memory_space<vmem>>, vector<32x32xbf16>
    %cst = arith.constant dense<0.000000e+00> : vector<32x32xf32>
    %2 = tpu.matmul %0, %1, %cst {dimension_numbers = #tpu.dot_dimension_numbers<[1], [0], [0], [1], [0, 0, 1, 1], [], []>} : vector<32x32xbf16>, vector<32x32xbf16>, vector<32x32xf32> -> vector<32x32xf32>
    %c0_3 = arith.constant 0 : index
    %c0_4 = arith.constant 0 : index
    %3 = vector.load %arg3[%c0_3, %c0_4] : memref<1x32xf32, #tpu.memory_space<vmem>>, vector<1x32xf32>
    %4 = vector.broadcast %3 : vector<1x32xf32> to vector<32x32xf32>
    %5 = arith.addf %2, %4 : vector<32x32xf32>
    %cst_5 = arith.constant 0.000000e+00 : f32
    %6 = vector.broadcast %cst_5 : f32 to vector<32x32xf32>
    %7 = arith.maximumf %5, %6 : vector<32x32xf32>
    %8 = arith.truncf %7 : vector<32x32xf32> to vector<32x32xbf16>
    %c0_6 = arith.constant 0 : index
    %c0_7 = arith.constant 0 : index
    %9 = vector.load %arg4[%c0_6, %c0_7] : memref<32x32xbf16, #tpu.memory_space<vmem>>, vector<32x32xbf16>
    %cst_8 = arith.constant dense<0.000000e+00> : vector<32x32xf32>
    %10 = tpu.matmul %8, %9, %cst_8 {dimension_numbers = #tpu.dot_dimension_numbers<[1], [0], [0], [1], [0, 0, 1, 1], [], []>} : vector<32x32xbf16>, vector<32x32xbf16>, vector<32x32xf32> -> vector<32x32xf32>
    %c0_9 = arith.constant 0 : index
    %c0_10 = arith.constant 0 : index
    %11 = vector.load %arg5[%c0_9, %c0_10] : memref<1x32xf32, #tpu.memory_space<vmem>>, vector<1x32xf32>
    %12 = vector.broadcast %11 : vector<1x32xf32> to vector<32x32xf32>
    %13 = arith.addf %10, %12 : vector<32x32xf32>
    %c0_11 = arith.constant 0 : index
    %c0_12 = arith.constant 0 : index
    %14 = vector.load %arg6[%c0_11, %c0_12] : memref<32x32xf32, #tpu.memory_space<vmem>>, vector<32x32xf32>
    tpu.vector_store %arg6[%c0_11, %c0_12], %13 {strides = array<i32>} : memref<32x32xf32, #tpu.memory_space<vmem>>, vector<32x32xf32>,
    return
  }
  func.func @transform_0(%arg0: i32) -> (i32, i32) {
    %c0_i32 = arith.constant 0 : i32
    %c0_i32_0 = arith.constant 0 : i32
    return %arg0, %c0_i32 : i32, i32
  }
  func.func @transform_1(%arg0: i32) -> (i32, i32) {
    %c0_i32 = arith.constant 0 : i32
    %c0_i32_0 = arith.constant 0 : i32
    %c0_i32_1 = arith.constant 0 : i32
    return %c0_i32, %c0_i32_0 : i32, i32
  }
  func.func @transform_2(%arg0: i32) -> (i32, i32) {
    %c0_i32 = arith.constant 0 : i32
    %c0_i32_0 = arith.constant 0 : i32
    %c0_i32_1 = arith.constant 0 : i32
    return %c0_i32, %c0_i32_0 : i32, i32
  }
  func.func @transform_3(%arg0: i32) -> (i32, i32) {
    %c0_i32 = arith.constant 0 : i32
    %c0_i32_0 = arith.constant 0 : i32
    %c0_i32_1 = arith.constant 0 : i32
    return %c0_i32, %c0_i32_0 : i32, i32
  }
  func.func @transform_4(%arg0: i32) -> (i32, i32) {
    %c0_i32 = arith.constant 0 : i32
    %c0_i32_0 = arith.constant 0 : i32
    %c0_i32_1 = arith.constant 0 : i32
    return %c0_i32, %c0_i32_0 : i32, i32
  }
  func.func @transform_5(%arg0: i32) -> (i32, i32) {
    %c0_i32 = arith.constant 0 : i32
    %c0_i32_0 = arith.constant 0 : i32
    return %arg0, %c0_i32 : i32, i32
  }
}

</mosaic_0001>

<llo_original>
// kernel: _graph_update_jit.3
$region0: #{_graph_update_jit.3}
  #allocation0 [shape = 'u32[]', space=smem, size = 0x4, offset = 0x4, fixed_abs, tag = 'smem constant byte address 0x4 - core index']
  #allocation1 [shape = 'u32[144,128]{1,0:T(1,128)}', space=vmem, size = 0x12000, scoped, tag = 'internal scratch']
  %s0 = inlined_call_operand.vmem [shape: bf16[32,32], index: 0, kind: input, shape index: {}]
  %s1 = inlined_call_operand.vmem [shape: bf16[32,32], index: 1, kind: input, shape index: {}]
  %s2 = inlined_call_operand.vmem [shape: f32[1,32], index: 2, kind: input, shape index: {}]
  %s3 = inlined_call_operand.vmem [shape: bf16[32,32], index: 3, kind: input, shape index: {}]
  %s4 = inlined_call_operand.vmem [shape: f32[1,32], index: 4, kind: input, shape index: {}]
  %s5 = inlined_call_operand.hbm [shape: f32[32,32], index: 5, kind: output, shape index: {}]
  %s6 = sld [smem:[#allocation0]]
  $region30: #{_graph_update_jit.3} parent=0
    _
  %s8 = ssub.s32 1, %s6
  %s9 = scalar_select 0, %s8, %s6
  $region1: #{_graph_update_jit.3} parent=0
    #allocation2 [shape = 'u8[16384]{0}', space=vmem, size = 0x4000, scoped, tag = 'output window, operand 0, single buffered']
    #allocation3 [shape = 's32[1]{0}', space=sflag, size = 0x4, scoped, tag = 'scoped memory for _graph_update_jit.3']
    %10 = vsyncpa [#allocation3], 0
    // Predicated region
    $region2: #{_graph_update_jit.3} parent=1 // pred_check
      _
    $region3: #{_graph_update_jit.3} parent=1 // pred_check_branch
      %12 = sbr.rel (0) target = $region5
    $region4: #{_graph_update_jit.3} parent=1 // pred_region
      _
    $region5: #{_graph_update_jit.3} parent=1 // pred_fallthru
      _
    // Predicated region
    $region6: #{_graph_update_jit.3} parent=1 // pred_check
      _
    $region7: #{_graph_update_jit.3} parent=1 // pred_check_branch
      %14 = sbr.rel (0) target = $region9
    $region8: #{_graph_update_jit.3} parent=1 // pred_region
      _
    $region9: #{_graph_update_jit.3} parent=1 // pred_fallthru
      _
    // Predicated region
    $region10: #{_graph_update_jit.3} parent=1 // pred_check
      _
    $region11: #{_graph_update_jit.3} parent=1 // pred_check_branch
      %16 = sbr.rel (0) target = $region13
    $region12: #{_graph_update_jit.3} parent=1 // pred_region
      _
    $region13: #{_graph_update_jit.3} parent=1 // pred_fallthru
      _
    // Predicated region
    $region14: #{_graph_update_jit.3} parent=1 // pred_check
      _
    $region15: #{_graph_update_jit.3} parent=1 // pred_check_branch
      %18 = sbr.rel (0) target = $region17
    $region16: #{_graph_update_jit.3} parent=1 // pred_region
      _
    $region17: #{_graph_update_jit.3} parent=1 // pred_fallthru
      _
    // Predicated region
    $region18: #{_graph_update_jit.3} parent=1 // pred_check
      _
    $region19: #{_graph_update_jit.3} parent=1 // pred_check_branch
      %20 = sbr.rel (0) target = $region21
    $region20: #{_graph_update_jit.3} parent=1 // pred_region
      _
    $region21: #{_graph_update_jit.3} parent=1 // pred_fallthru
      _
    %v22 = vld [vmem:[%s0] sm:$0xf]
    %v23 = vld [vmem:[%s0 + $0x4] sm:$0xf]
    %v24 = vld [vmem:[%s0 + $0x8] sm:$0xf]
    %v25 = vld [vmem:[%s0 + $0xc] sm:$0xf]
    %v26 = vld [vmem:[%s1] sm:$0xf]
    %v27 = vld [vmem:[%s1 + $0x4] sm:$0xf]
    %v28 = vld [vmem:[%s1 + $0x8] sm:$0xf]
    %v29 = vld [vmem:[%s1 + $0xc] sm:$0xf]
    %v30 = vld [vmem:[%s2] sm:$0x1]
    %v32 = vlaneseq
    %v33 = vshrl.u32 %v32, 7
    %v34 = vsub.s32 0, %v33
    %v35 = vrot.slane %v30, %v34
    %v41 = vunpack.c.l.b16 %v22
    %v42 = vunpack.c.l.b16 %v23
    %v43 = vunpack.c.l.b16 %v24
    %v44 = vunpack.c.l.b16 %v25
    %v45 = vpack.c.b16 %v42, %v41
    %v46 = vpack.c.b16 %v44, %v43
    %v51 = vunpack.c.l.b16 %v26
    %v52 = vunpack.c.l.b16 %v27
    %v53 = vunpack.c.l.b16 %v28
    %v54 = vunpack.c.l.b16 %v29
    %v55 = vpack.c.b16 %v52, %v51
    %v56 = vpack.c.b16 %v54, %v53
    %vm59 = vcmask 261120
    %v61 = vsel %vm59, %v45, 0
    %v64 = vsel %vm59, %v46, 0
    %66 = vmatprep.subr.bf16.mxu0 0
    %67 = vmatpush1.bf16.msra.mxu0 0
    %68 = vmatprep.subr.bf16.mxu0 0
    %69 = vmatpush1.bf16.msra.mxu0 0
    %70 = vmatprep.subr.bf16.mxu0 0
    %71 = vmatpush1.bf16.msra.mxu0 0
    %72 = vmatprep.subr.bf16.mxu0 0
    %73 = vmatpush1.bf16.msra.mxu0 0
    %74 = vmatprep.subr.bf16.mxu0 0
    %75 = vmatpush1.bf16.msra.mxu0 0
    %76 = vmatprep.subr.bf16.mxu0 0
    %77 = vmatpush1.bf16.msra.mxu0 0
    %78 = vmatprep.subr.bf16.mxu0 0
    %79 = vmatpush1.bf16.msra.mxu0 %v56
    %80 = vmatprep.subr.bf16.mxu0 0
    %81 = vmatpush1.bf16.msra.mxu0 %v55
    %82 = vmatprep.subr.bf16.mxu0 0
    %83 = vmatpush2.bf16.msra.mxu0 0
    %84 = vmatprep.subr.bf16.mxu0 0
    %85 = vmatpush2.bf16.msra.mxu0 0
    %86 = vmatprep.subr.bf16.mxu0 0
    %87 = vmatpush2.bf16.msra.mxu0 0
    %88 = vmatprep.subr.bf16.mxu0 0
    %89 = vmatpush2.bf16.msra.mxu0 0
    %90 = vmatprep.subr.bf16.mxu0 0
    %91 = vmatpush2.bf16.msra.mxu0 0
    %92 = vmatprep.subr.bf16.mxu0 0
    %93 = vmatpush2.bf16.msra.mxu0 0
    %94 = vmatprep.subr.bf16.mxu0 0
    %95 = vmatpush2.bf16.msra.mxu0 0
    %96 = vmatprep.subr.bf16.mxu0 0
    %97 = vmatpush2.bf16.msra.mxu0 0
    %98 = vmatprep.mubr.bf16.mxu0 0
    %99 = vmatmul.mubr.bf16.gmra.mxu0 %v61
    %v100 = vpop.f32.mrf.mxu0
    %v101 = vadd.f32 %v35, %v100
    %v102 = vpop.f32.mrf.mxu0
    %v103 = vpop.f32.mrf.mxu0
    %v104 = vadd.f32 %v35, %v103
    %v105 = vpop.f32.mrf.mxu0
    %106 = vmatprep.mubr.bf16.mxu0 0
    %107 = vmatmul.mubr.bf16.gmra.mxu0 %v64
    %v108 = vpop.f32.mrf.mxu0
    %v109 = vadd.f32 %v35, %v108
    %v110 = vpop.f32.mrf.mxu0
    %v111 = vpop.f32.mrf.mxu0
    %v112 = vadd.f32 %v35, %v111
    %v113 = vpop.f32.mrf.mxu0
    %114 = vdwg.mxu0
    %v115 = vmax.f32 %v101, 0.0
    %v116 = vmax.f32 %v104, 0.0
    %v117 = vmax.f32 %v109, 0.0
    %v118 = vmax.f32 %v112, 0.0
    %v119 = vpack.c.bf16 %v116, %v115
    %v120 = vpack.c.bf16 %v118, %v117
    %v121 = vld [vmem:[%s3] sm:$0xf]
    %v122 = vld [vmem:[%s3 + $0x4] sm:$0xf]
    %v123 = vld [vmem:[%s3 + $0x8] sm:$0xf]
    %v124 = vld [vmem:[%s3 + $0xc] sm:$0xf]
    %v125 = vld [vmem:[%s4] sm:$0x1]
    %v127 = vlaneseq
    %v128 = vshrl.u32 %v127, 7
    %v129 = vsub.s32 0, %v128
    %v130 = vrot.slane %v125, %v129
    %v136 = vunpack.c.l.b16 %v121
    %v137 = vunpack.c.l.b16 %v122
    %v138 = vunpack.c.l.b16 %v123
    %v139 = vunpack.c.l.b16 %v124
    %v140 = vpack.c.b16 %v137, %v136
    %v141 = vpack.c.b16 %v139, %v138
    %v145 = vsel %vm59, %v119, 0
    %v148 = vsel %vm59, %v120, 0
    %150 = vmatprep.subr.bf16.mxu0 0
    %151 = vmatpush1.bf16.msra.mxu0 0
    %152 = vmatprep.subr.bf16.mxu0 0
    %153 = vmatpush1.bf16.msra.mxu0 0
    %154 = vmatprep.subr.bf16.mxu0 0
    %155 = vmatpush1.bf16.msra.mxu0 0
    %156 = vmatprep.subr.bf16.mxu0 0
    %157 = vmatpush1.bf16.msra.mxu0 0
    %158 = vmatprep.subr.bf16.mxu0 0
    %159 = vmatpush1.bf16.msra.mxu0 0
    %160 = vmatprep.subr.bf16.mxu0 0
    %161 = vmatpush1.bf16.msra.mxu0 0
    %162 = vmatprep.subr.bf16.mxu0 0
    %163 = vmatpush1.bf16.msra.mxu0 %v141
    %164 = vmatprep.subr.bf16.mxu0 0
    %165 = vmatpush1.bf16.msra.mxu0 %v140
    %166 = vmatprep.subr.bf16.mxu0 0
    %167 = vmatpush2.bf16.msra.mxu0 0
    %168 = vmatprep.subr.bf16.mxu0 0
    %169 = vmatpush2.bf16.msra.mxu0 0
    %170 = vmatprep.subr.bf16.mxu0 0
    %171 = vmatpush2.bf16.msra.mxu0 0
    %172 = vmatprep.subr.bf16.mxu0 0
    %173 = vmatpush2.bf16.msra.mxu0 0
    %174 = vmatprep.subr.bf16.mxu0 0
    %175 = vmatpush2.bf16.msra.mxu0 0
    %176 = vmatprep.subr.bf16.mxu0 0
    %177 = vmatpush2.bf16.msra.mxu0 0
    %178 = vmatprep.subr.bf16.mxu0 0
    %179 = vmatpush2.bf16.msra.mxu0 0
    %180 = vmatprep.subr.bf16.mxu0 0
    %181 = vmatpush2.bf16.msra.mxu0 0
    %182 = vmatprep.mubr.bf16.mxu0 0
    %183 = vmatmul.mubr.bf16.gmra.mxu0 %v145
    %v184 = vpop.f32.mrf.mxu0
    %v185 = vadd.f32 %v130, %v184
    %v186 = vpop.f32.mrf.mxu0
    %v187 = vpop.f32.mrf.mxu0
    %v188 = vadd.f32 %v130, %v187
    %v189 = vpop.f32.mrf.mxu0
    %190 = vmatprep.mubr.bf16.mxu0 0
    %191 = vmatmul.mubr.bf16.gmra.mxu0 %v148
    %v192 = vpop.f32.mrf.mxu0
    %v193 = vadd.f32 %v130, %v192
    %v194 = vpop.f32.mrf.mxu0
    %v195 = vpop.f32.mrf.mxu0
    %v196 = vadd.f32 %v130, %v195
    %v197 = vpop.f32.mrf.mxu0
    %198 = vdwg.mxu0
    %199 = vst.msk [vmem:[#allocation2] sm:$0xff] %vm59, %v185
    %200 = vst.msk [vmem:[#allocation2 + $0x8] sm:$0xff] %vm59, %v188
    %201 = vst.msk [vmem:[#allocation2 + $0x10] sm:$0xff] %vm59, %v193
    %202 = vst.msk [vmem:[#allocation2 + $0x18] sm:$0xff] %vm59, %v196
    // Predicated region
    $region22: #{_graph_update_jit.3} parent=1 // pred_check
      _
    $region23: #{_graph_update_jit.3} parent=1 // pred_check_branch
      %204 = sbr.rel (0) target = $region25
    $region24: #{_graph_update_jit.3} parent=1 // pred_region
      %s206 = ssub.s32 512, 512
      %207 = vsyncadd [#allocation3], %s206
      %s208 = sshll.u32 [#allocation2], 4
      %s209 = int_to_ptr.vmem [resolvable:$true] %s208
      %214 = dma.vmem_to_hbm [thread:$0]  %s209, 512, %s5, [#allocation3], 128, 128, 8
    $region25: #{_graph_update_jit.3} parent=1 // pred_fallthru
      _
    // Predicated region
    $region26: #{_graph_update_jit.3} parent=1 // pred_check
      _
    $region27: #{_graph_update_jit.3} parent=1 // pred_check_branch
      %216 = sbr.rel (0) target = $region29
    $region28: #{_graph_update_jit.3} parent=1 // pred_region
      %217 = dma.done [#allocation3], 512
    $region29: #{_graph_update_jit.3} parent=1 // pred_fallthru
      _
    %218 = vsyncpa [#allocation3], 1

// kernel: _graph_update_jit.2
$region0: #{_graph_update_jit.2}
  #allocation0 [shape = 'u32[]', space=smem, size = 0x4, offset = 0x4, fixed_abs, tag = 'smem constant byte address 0x4 - core index']
  #allocation1 [shape = 'u32[144,128]{1,0:T(1,128)}', space=vmem, size = 0x12000, scoped, tag = 'internal scratch']
  %s0 = inlined_call_operand.vmem [shape: bf16[16,32], index: 0, kind: input, shape index: {}]
  %s1 = inlined_call_operand.vmem [shape: bf16[32,32], index: 1, kind: input, shape index: {}]
  %s2 = inlined_call_operand.vmem [shape: f32[1,32], index: 2, kind: input, shape index: {}]
  %s3 = inlined_call_operand.vmem [shape: bf16[32,32], index: 3, kind: input, shape index: {}]
  %s4 = inlined_call_operand.vmem [shape: f32[1,32], index: 4, kind: input, shape index: {}]
  %s5 = inlined_call_operand.hbm [shape: f32[16,32], index: 5, kind: output, shape index: {}]
  %s6 = sld [smem:[#allocation0]]
  $region30: #{_graph_update_jit.2} parent=0
    _
  %s8 = ssub.s32 1, %s6
  %s9 = scalar_select 0, %s8, %s6
  $region1: #{_graph_update_jit.2} parent=0
    #allocation2 [shape = 'u8[8192]{0}', space=vmem, size = 0x2000, scoped, tag = 'output window, operand 0, single buffered']
    #allocation3 [shape = 's32[1]{0}', space=sflag, size = 0x4, scoped, tag = 'scoped memory for _graph_update_jit.2']
    %10 = vsyncpa [#allocation3], 0
    // Predicated region
    $region2: #{_graph_update_jit.2} parent=1 // pred_check
      _
    $region3: #{_graph_update_jit.2} parent=1 // pred_check_branch
      %12 = sbr.rel (0) target = $region5
    $region4: #{_graph_update_jit.2} parent=1 // pred_region
      _
    $region5: #{_graph_update_jit.2} parent=1 // pred_fallthru
      _
    // Predicated region
    $region6: #{_graph_update_jit.2} parent=1 // pred_check
      _
    $region7: #{_graph_update_jit.2} parent=1 // pred_check_branch
      %14 = sbr.rel (0) target = $region9
    $region8: #{_graph_update_jit.2} parent=1 // pred_region
      _
    $region9: #{_graph_update_jit.2} parent=1 // pred_fallthru
      _
    // Predicated region
    $region10: #{_graph_update_jit.2} parent=1 // pred_check
      _
    $region11: #{_graph_update_jit.2} parent=1 // pred_check_branch
      %16 = sbr.rel (0) target = $region13
    $region12: #{_graph_update_jit.2} parent=1 // pred_region
      _
    $region13: #{_graph_update_jit.2} parent=1 // pred_fallthru
      _
    // Predicated region
    $region14: #{_graph_update_jit.2} parent=1 // pred_check
      _
    $region15: #{_graph_update_jit.2} parent=1 // pred_check_branch
      %18 = sbr.rel (0) target = $region17
    $region16: #{_graph_update_jit.2} parent=1 // pred_region
      _
    $region17: #{_graph_update_jit.2} parent=1 // pred_fallthru
      _
    // Predicated region
    $region18: #{_graph_update_jit.2} parent=1 // pred_check
      _
    $region19: #{_graph_update_jit.2} parent=1 // pred_check_branch
      %20 = sbr.rel (0) target = $region21
    $region20: #{_graph_update_jit.2} parent=1 // pred_region
      _
    $region21: #{_graph_update_jit.2} parent=1 // pred_fallthru
      _
    %v22 = vld [vmem:[%s0] sm:$0xf]
    %v23 = vld [vmem:[%s0 + $0x4] sm:$0xf]
    %v24 = vld [vmem:[%s1] sm:$0xf]
    %v25 = vld [vmem:[%s1 + $0x4] sm:$0xf]
    %v26 = vld [vmem:[%s1 + $0x8] sm:$0xf]
    %v27 = vld [vmem:[%s1 + $0xc] sm:$0xf]
    %v28 = vld [vmem:[%s2] sm:$0x1]
    %v30 = vlaneseq
    %v31 = vshrl.u32 %v30, 7
    %v32 = vsub.s32 0, %v31
    %v33 = vrot.slane %v28, %v32
    %v37 = vunpack.c.l.b16 %v22
    %v38 = vunpack.c.l.b16 %v23
    %v39 = vpack.c.b16 %v38, %v37
    %v44 = vunpack.c.l.b16 %v24
    %v45 = vunpack.c.l.b16 %v25
    %v46 = vunpack.c.l.b16 %v26
    %v47 = vunpack.c.l.b16 %v27
    %v48 = vpack.c.b16 %v45, %v44
    %v49 = vpack.c.b16 %v47, %v46
    %vm52 = vcmask 261120
    %v54 = vsel %vm52, %v39, 0
    %56 = vmatprep.subr.bf16.mxu0 0
    %57 = vmatpush1.bf16.msra.mxu0 0
    %58 = vmatprep.subr.bf16.mxu0 0
    %59 = vmatpush1.bf16.msra.mxu0 0
    %60 = vmatprep.subr.bf16.mxu0 0
    %61 = vmatpush1.bf16.msra.mxu0 0
    %62 = vmatprep.subr.bf16.mxu0 0
    %63 = vmatpush1.bf16.msra.mxu0 0
    %64 = vmatprep.subr.bf16.mxu0 0
    %65 = vmatpush1.bf16.msra.mxu0 0
    %66 = vmatprep.subr.bf16.mxu0 0
    %67 = vmatpush1.bf16.msra.mxu0 0
    %68 = vmatprep.subr.bf16.mxu0 0
    %69 = vmatpush1.bf16.msra.mxu0 %v49
    %70 = vmatprep.subr.bf16.mxu0 0
    %71 = vmatpush1.bf16.msra.mxu0 %v48
    %72 = vmatprep.subr.bf16.mxu0 0
    %73 = vmatpush2.bf16.msra.mxu0 0
    %74 = vmatprep.subr.bf16.mxu0 0
    %75 = vmatpush2.bf16.msra.mxu0 0
    %76 = vmatprep.subr.bf16.mxu0 0
    %77 = vmatpush2.bf16.msra.mxu0 0
    %78 = vmatprep.subr.bf16.mxu0 0
    %79 = vmatpush2.bf16.msra.mxu0 0
    %80 = vmatprep.subr.bf16.mxu0 0
    %81 = vmatpush2.bf16.msra.mxu0 0
    %82 = vmatprep.subr.bf16.mxu0 0
    %83 = vmatpush2.bf16.msra.mxu0 0
    %84 = vmatprep.subr.bf16.mxu0 0
    %85 = vmatpush2.bf16.msra.mxu0 0
    %86 = vmatprep.subr.bf16.mxu0 0
    %87 = vmatpush2.bf16.msra.mxu0 0
    %88 = vmatprep.mubr.bf16.mxu0 0
    %89 = vmatmul.mubr.bf16.gmra.mxu0 %v54
    %v90 = vpop.f32.mrf.mxu0
    %v91 = vadd.f32 %v33, %v90
    %v92 = vpop.f32.mrf.mxu0
    %v93 = vpop.f32.mrf.mxu0
    %v94 = vadd.f32 %v33, %v93
    %v95 = vpop.f32.mrf.mxu0
    %96 = vdwg.mxu0
    %v97 = vmax.f32 %v91, 0.0
    %v98 = vmax.f32 %v94, 0.0
    %v99 = vpack.c.bf16 %v98, %v97
    %v100 = vld [vmem:[%s3] sm:$0xf]
    %v101 = vld [vmem:[%s3 + $0x4] sm:$0xf]
    %v102 = vld [vmem:[%s3 + $0x8] sm:$0xf]
    %v103 = vld [vmem:[%s3 + $0xc] sm:$0xf]
    %v104 = vld [vmem:[%s4] sm:$0x1]
    %v106 = vlaneseq
    %v107 = vshrl.u32 %v106, 7
    %v108 = vsub.s32 0, %v107
    %v109 = vrot.slane %v104, %v108
    %v115 = vunpack.c.l.b16 %v100
    %v116 = vunpack.c.l.b16 %v101
    %v117 = vunpack.c.l.b16 %v102
    %v118 = vunpack.c.l.b16 %v103
    %v119 = vpack.c.b16 %v116, %v115
    %v120 = vpack.c.b16 %v118, %v117
    %v124 = vsel %vm52, %v99, 0
    %126 = vmatprep.subr.bf16.mxu0 0
    %127 = vmatpush1.bf16.msra.mxu0 0
    %128 = vmatprep.subr.bf16.mxu0 0
    %129 = vmatpush1.bf16.msra.mxu0 0
    %130 = vmatprep.subr.bf16.mxu0 0
    %131 = vmatpush1.bf16.msra.mxu0 0
    %132 = vmatprep.subr.bf16.mxu0 0
    %133 = vmatpush1.bf16.msra.mxu0 0
    %134 = vmatprep.subr.bf16.mxu0 0
    %135 = vmatpush1.bf16.msra.mxu0 0
    %136 = vmatprep.subr.bf16.mxu0 0
    %137 = vmatpush1.bf16.msra.mxu0 0
    %138 = vmatprep.subr.bf16.mxu0 0
    %139 = vmatpush1.bf16.msra.mxu0 %v120
    %140 = vmatprep.subr.bf16.mxu0 0
    %141 = vmatpush1.bf16.msra.mxu0 %v119
    %142 = vmatprep.subr.bf16.mxu0 0
    %143 = vmatpush2.bf16.msra.mxu0 0
    %144 = vmatprep.subr.bf16.mxu0 0
    %145 = vmatpush2.bf16.msra.mxu0 0
    %146 = vmatprep.subr.bf16.mxu0 0
    %147 = vmatpush2.bf16.msra.mxu0 0
    %148 = vmatprep.subr.bf16.mxu0 0
    %149 = vmatpush2.bf16.msra.mxu0 0
    %150 = vmatprep.subr.bf16.mxu0 0
    %151 = vmatpush2.bf16.msra.mxu0 0
    %152 = vmatprep.subr.bf16.mxu0 0
    %153 = vmatpush2.bf16.msra.mxu0 0
    %154 = vmatprep.subr.bf16.mxu0 0
    %155 = vmatpush2.bf16.msra.mxu0 0
    %156 = vmatprep.subr.bf16.mxu0 0
    %157 = vmatpush2.bf16.msra.mxu0 0
    %158 = vmatprep.mubr.bf16.mxu0 0
    %159 = vmatmul.mubr.bf16.gmra.mxu0 %v124
    %v160 = vpop.f32.mrf.mxu0
    %v161 = vadd.f32 %v109, %v160
    %v162 = vpop.f32.mrf.mxu0
    %v163 = vpop.f32.mrf.mxu0
    %v164 = vadd.f32 %v109, %v163
    %v165 = vpop.f32.mrf.mxu0
    %166 = vdwg.mxu0
    %167 = vst.msk [vmem:[#allocation2] sm:$0xff] %vm52, %v161
    %168 = vst.msk [vmem:[#allocation2 + $0x8] sm:$0xff] %vm52, %v164
    // Predicated region
    $region22: #{_graph_update_jit.2} parent=1 // pred_check
      _
    $region23: #{_graph_update_jit.2} parent=1 // pred_check_branch
      %170 = sbr.rel (0) target = $region25
    $region24: #{_graph_update_jit.2} parent=1 // pred_region
      %s172 = ssub.s32 256, 256
      %173 = vsyncadd [#allocation3], %s172
      %s174 = sshll.u32 [#allocation2], 4
      %s175 = int_to_ptr.vmem [resolvable:$true] %s174
      %180 = dma.vmem_to_hbm [thread:$0]  %s175, 256, %s5, [#allocation3], 128, 128, 8
    $region25: #{_graph_update_jit.2} parent=1 // pred_fallthru
      _
    // Predicated region
    $region26: #{_graph_update_jit.2} parent=1 // pred_check
      _
    $region27: #{_graph_update_jit.2} parent=1 // pred_check_branch
      %182 = sbr.rel (0) target = $region29
    $region28: #{_graph_update_jit.2} parent=1 // pred_region
      %183 = dma.done [#allocation3], 256
    $region29: #{_graph_update_jit.2} parent=1 // pred_fallthru
      _
    %184 = vsyncpa [#allocation3], 1

</llo_original>
